<compile_context>
chip_gen: v5e
topology: v5e:2x2
jax: 0.10.0
libtpu: 0.0.40
codegen_flags: <defaults>
</compile_context>

<pallas_src>
import functools

import jax
import jax.numpy as jnp
import numpy as np
from jax.experimental import pallas as pl
from jax.experimental.pallas import tpu as pltpu


# ---------------------------------------------------------------------------
# Kernel 1: packed per-head linear projection.
#   h_all[:, h*c:(h+1)*c] = x @ W_h^T + b_h
#   f_all[:, h]     = h_h @ v0_h   (f1 of head h)
#   f_all[:, H + h] = h_h @ v1_h   (f2 of head h)
# ---------------------------------------------------------------------------
def _gat_proj_kernel(x_ref, w_ref, b_ref, v_ref, h_ref, f_ref):
    h = jnp.dot(x_ref[...], w_ref[...], preferred_element_type=jnp.float32)
    h = h + b_ref[...]
    h_ref[...] = h
    f_ref[...] = jnp.dot(h, v_ref[...], preferred_element_type=jnp.float32)


# ---------------------------------------------------------------------------
# Kernel 2: masked sparse-softmax attention + aggregation (online softmax).
# grid = (row tiles [parallel], neighbor-column tiles [arbitrary reduction]).
# ---------------------------------------------------------------------------
def _gat_attn_kernel(f1_ref, f2t_ref, adj_ref, hcols_ref, out_ref,
                     m_sc, l_sc, acc_sc, *, n_heads, c_out_h, inv_temp):
    j = pl.program_id(1)

    @pl.when(j == 0)
    def _():
        m_sc[...] = jnp.full_like(m_sc, -1e30)
        l_sc[...] = jnp.zeros_like(l_sc)
        acc_sc[...] = jnp.zeros_like(acc_sc)

    adj_nz = adj_ref[...] != 0              # [tile_n, tile_k] bool (adj is 0/1)
    h_cols = hcols_ref[...]                 # [tile_k, H*c_out_h] f32
    f1 = f1_ref[...]                        # [tile_n, H] f32
    f2t = f2t_ref[...]                      # [H, tile_k] f32 (pre-transposed)

    for h in range(n_heads):
        lo = h * c_out_h
        # z == logits wherever adj == 1; the sparsity set is adj!=0 AND z!=0
        # (matches (adj*(f1+f2.T)).to_sparse() for a binary adjacency).
        z = f1[:, h:h + 1] + f2t[h:h + 1, :]                      # [tn, tk]
        mask = adj_nz & (z != 0.0)
        # (sigmoid(z) - 0.5) / temp == 0.5 * tanh(0.5 * z) / temp  (1 EUP op)
        s = (0.5 * inv_temp) * jnp.tanh(0.5 * z)
        s_m = jnp.where(mask, s, jnp.float32(-1e30))

        m_prev = m_sc[:, h:h + 1]
        m_new = jnp.maximum(m_prev, jnp.max(s_m, axis=1, keepdims=True))
        alpha = jnp.exp(m_prev - m_new)
        e = jnp.where(mask, jnp.exp(s_m - m_new), 0.0)

        l_sc[:, h:h + 1] = alpha * l_sc[:, h:h + 1] + jnp.sum(
            e, axis=1, keepdims=True)
        acc_sc[:, lo:lo + c_out_h] = (
            alpha * acc_sc[:, lo:lo + c_out_h]
            + jnp.dot(e, h_cols[:, lo:lo + c_out_h],
                      preferred_element_type=jnp.float32))
        m_sc[:, h:h + 1] = m_new

    @pl.when(j == pl.num_programs(1) - 1)
    def _():
        # Exact reciprocal: off the O(N^2) hot path, keeps tight tolerance.
        # Rows with no surviving entries have acc == 0 -> output row stays 0.
        inv_l = pl.reciprocal(jnp.maximum(l_sc[...], jnp.float32(1e-30)))
        for h in range(n_heads):
            lo = h * c_out_h
            out_ref[:, lo:lo + c_out_h] = (
                acc_sc[:, lo:lo + c_out_h] * inv_l[:, h:h + 1])


# ---------------------------------------------------------------------------
# Wrapper
# ---------------------------------------------------------------------------
def _pick_tile(n, target, multiple):
    """Largest multiple of `multiple` that divides n and is <= target; else n."""
    t = min(target, n)
    t -= t % multiple
    while t >= multiple:
        if n % t == 0:
            return t
        t -= multiple
    return n


def _vmem_limit_bytes(tile_n, tile_k, hc, n_heads):
    """Explicit scoped-VMEM budget sized from the double-buffered tiles."""
    f32, dbl = 4, 2
    tiles = (tile_n * tile_k * 1 * dbl            # adj tile (int8)
             + tile_k * hc * f32 * dbl            # h neighbor-column block
             + n_heads * tile_k * f32 * dbl       # f2^T column block
             + tile_n * n_heads * f32 * dbl       # f1 row block
             + tile_n * hc * f32 * dbl)           # output row block
    scratch = tile_n * (2 * n_heads + hc) * f32   # m / l / acc
    temps = 6 * tile_n * tile_k * f32             # z / mask / s / e live slabs
    budget = int(1.5 * (tiles + scratch + temps)) + (4 << 20)
    # TODO(synk): make the cap generation-aware (<=56 MiB on v7x, ~100 MiB on
    # v5e/v6e) via pltpu.get_tpu_info once tile sizes are tuned per chip.
    return max(32 << 20, min(96 << 20, budget))


def gat_multihead(x, adj, w_t, b, v0, v1, *, temp=1.0, concat_heads=True,
                  tile_n=None, tile_k=None):
    """x: [N, c_in]; adj: [N, N] binary 0/1 adjacency (weighted adj unsupported);
    w_t: [H, c_in, c_out_h]; b, v0, v1: [H, 1, c_out_h]."""
    H, c_in, c_out_h = w_t.shape
    N = x.shape[0]
    hc = H * c_out_h

    if tile_n is None:
        tile_n = _pick_tile(N, 256, 32)    # 32-row alignment for int8 adj
    if tile_k is None:
        tile_k = _pick_tile(N, 512, 128)   # lane tile of adj columns
    assert N % tile_n == 0 and N % tile_k == 0
    assert tile_n == N or tile_n % 32 == 0
    assert tile_k == N or tile_k % 128 == 0
    # TODO(synk): pad ragged N instead of asserting divisibility.

    # ---- pack per-head parameters once (head-major lanes = concat order) ----
    w_all = jnp.transpose(w_t, (1, 0, 2)).reshape(c_in, hc).astype(jnp.float32)
    b_all = b.reshape(1, hc).astype(jnp.float32)
    v_all = jnp.zeros((hc, 2 * H), dtype=jnp.float32)   # block-diag v0 | v1
    for h in range(H):
        v_all = v_all.at[h * c_out_h:(h + 1) * c_out_h, h].set(v0[h, 0])
        v_all = v_all.at[h * c_out_h:(h + 1) * c_out_h, H + h].set(v1[h, 0])

    # ---- kernel 1: projection, one pass over the nodes ----
    tile_p = tile_n
    h_all, f_all = pl.pallas_call(
        _gat_proj_kernel,
        out_shape=(jax.ShapeDtypeStruct((N, hc), jnp.float32),
                   jax.ShapeDtypeStruct((N, 2 * H), jnp.float32)),
        grid=(N // tile_p,),
        in_specs=[
            pl.BlockSpec((tile_p, c_in), lambda i: (i, 0)),   # x rows
            pl.BlockSpec((c_in, hc), lambda i: (0, 0)),       # W_all (resident)
            pl.BlockSpec((1, hc), lambda i: (0, 0)),          # b_all
            pl.BlockSpec((hc, 2 * H), lambda i: (0, 0)),      # packed v0/v1
        ],
        out_specs=(pl.BlockSpec((tile_p, hc), lambda i: (i, 0)),
                   pl.BlockSpec((tile_p, 2 * H), lambda i: (i, 0))),
        compiler_params=pltpu.CompilerParams(
            dimension_semantics=("parallel",)),
    )(x.astype(jnp.float32), w_all, b_all, v_all)

    # f1 per head (row scores) and pre-transposed f2 (neighbor scores,
    # lane-dense along N) so the attention kernel never transposes. Tiny ops.
    f1_all = f_all[:, :H]
    f2t_all = jnp.transpose(f_all[:, H:])

    # adj is a binary mask -> int8 quarters the only O(N^2) HBM read vs f32.
    adj_i8 = (adj != 0).astype(jnp.int8)

    kernel = functools.partial(_gat_attn_kernel, n_heads=H, c_out_h=c_out_h,
                               inv_temp=1.0 / temp)

    out = pl.pallas_call(
        kernel,
        out_shape=jax.ShapeDtypeStruct((N, hc), jnp.float32),
        grid=(N // tile_n, N // tile_k),
        in_specs=[
            pl.BlockSpec((tile_n, H), lambda i, j: (i, 0)),       # f1 rows
            pl.BlockSpec((H, tile_k), lambda i, j: (0, j)),       # f2^T cols
            pl.BlockSpec((tile_n, tile_k), lambda i, j: (i, j)),  # adj tile
            pl.BlockSpec((tile_k, hc), lambda i, j: (j, 0)),      # h neighbors
        ],
        out_specs=pl.BlockSpec((tile_n, hc), lambda i, j: (i, 0)),
        scratch_shapes=[
            pltpu.VMEM((tile_n, H), jnp.float32),    # running max (per head)
            pltpu.VMEM((tile_n, H), jnp.float32),    # running denom
            pltpu.VMEM((tile_n, hc), jnp.float32),   # running numerator
        ],
        compiler_params=pltpu.CompilerParams(
            dimension_semantics=("parallel", "arbitrary"),
            vmem_limit_bytes=_vmem_limit_bytes(tile_n, tile_k, hc, H)),
    )(f1_all, f2t_all, adj_i8, h_all)

    if concat_heads:
        return out                                   # torch.cat(res, dim=1)
    return out.reshape(N, H, c_out_h).mean(axis=1)   # mean over heads


def _reference(x, adj, w_t, b, v0, v1, temp=1.0, concat_heads=True):
    """Pure-JAX mirror of the PyTorch forward, for validation."""
    H = w_t.shape[0]
    res = []
    for h_idx in range(H):
        h = x @ w_t[h_idx] + b[h_idx]
        f1 = jnp.sum(h * v0[h_idx], axis=1, keepdims=True)
        f2 = jnp.sum(h * v1[h_idx], axis=1, keepdims=True)
        logits = adj * (f1 + f2.T)
        mask = logits != 0.0
        s = (jax.nn.sigmoid(logits) - 0.5) / temp
        s_masked = jnp.where(mask, s, -1e30)
        row_max = jnp.max(s_masked, axis=1, keepdims=True)
        e = jnp.where(mask, jnp.exp(s_masked - row_max), 0.0)
        denom = jnp.sum(e, axis=1, keepdims=True)
        probs = jnp.where(denom > 0.0, e / jnp.maximum(denom, 1e-30), 0.0)
        res.append(probs @ h)
    if concat_heads:
        return jnp.concatenate(res, axis=1)
    return jnp.mean(jnp.stack(res, axis=0), axis=0)


if __name__ == "__main__":
    # Module config: GATMultiHead(c_in=32, c_out=32, n_heads=2, concat_heads=True)
    N, c_in, c_out, n_heads = 256, 32, 32, 2
    concat_heads = True
    temp = 1.0
    c_out_h = c_out // n_heads  # per-head output dim (concat_heads=True)

    key = jax.random.PRNGKey(0)
    kx, kadj, kw, kv0, kv1 = jax.random.split(key, 5)

    # Inputs
    x = jax.random.normal(kx, (N, c_in), dtype=jnp.float32)
    adj = (jax.random.uniform(kadj, (N, N)) < 0.1).astype(jnp.float32)
    adj = jnp.maximum(adj, jnp.eye(N, dtype=jnp.float32))  # self loops

    # Deterministic parameter init matching GATSingleHead.__init__ ranges
    lim_w = np.sqrt(6.0 / (c_in + c_out_h))
    lim_v = np.sqrt(6.0 / (c_out_h + 1))
    W = jax.random.uniform(kw, (n_heads, c_out_h, c_in),
                           minval=-lim_w, maxval=lim_w, dtype=jnp.float32)
    w_t = jnp.transpose(W, (0, 2, 1))                       # [H, c_in, c_out_h]
    b = jnp.zeros((n_heads, 1, c_out_h), dtype=jnp.float32)
    v0 = jax.random.uniform(kv0, (n_heads, 1, c_out_h),
                            minval=-lim_v, maxval=lim_v, dtype=jnp.float32)
    v1 = jax.random.uniform(kv1, (n_heads, 1, c_out_h),
                            minval=-lim_v, maxval=lim_v, dtype=jnp.float32)

    # tile_n=128 / tile_k=128 -> 2x2 grid: exercises the parallel row axis AND
    # the multi-block online-softmax column reduction.
    out = gat_multihead(x, adj, w_t, b, v0, v1, temp=temp,
                        concat_heads=concat_heads, tile_n=128, tile_k=128)
    out = jax.block_until_ready(out)

    ref = _reference(x, adj, w_t, b, v0, v1,
                     temp=temp, concat_heads=concat_heads)
    # tanh-vs-sigmoid formulation + online-softmax accumulation order give
    # ~1e-6-level deviations; 1e-4 keeps a comfortable margin.
    np.testing.assert_allclose(np.asarray(out), np.asarray(ref),
                               rtol=1e-4, atol=1e-4)

    print("KERNEL_OK")
</pallas_src>

<mosaic_0001>
module attributes {stable_mosaic.version = 11 : i64} {
  func.func @_gat_proj_kernel(%arg0: i32, %arg1: memref<128x32xf32, #tpu.memory_space<vmem>>, %arg2: memref<32x32xf32, #tpu.memory_space<vmem>>, %arg3: memref<1x32xf32, #tpu.memory_space<vmem>>, %arg4: memref<32x4xf32, #tpu.memory_space<vmem>>, %arg5: memref<128x32xf32, #tpu.memory_space<vmem>>, %arg6: memref<128x4xf32, #tpu.memory_space<vmem>>) attributes {dimension_semantics = [#tpu.dimension_semantics<parallel>], iteration_bounds = array<i64: 2>, scalar_prefetch = 0 : i64, scratch_operands = 0 : i64, tpu.core_type = #tpu.core_type<tc>, window_params = [{transform_indices = @transform_0, window_bounds = array<i64: 128, 32>}, {pipeline_mode = #tpu.pipeline_mode<synchronous>, transform_indices = @transform_1, window_bounds = array<i64: 32, 32>}, {pipeline_mode = #tpu.pipeline_mode<synchronous>, transform_indices = @transform_2, window_bounds = array<i64: 1, 32>}, {pipeline_mode = #tpu.pipeline_mode<synchronous>, transform_indices = @transform_3, window_bounds = array<i64: 32, 4>}, {transform_indices = @transform_4, window_bounds = array<i64: 128, 32>}, {transform_indices = @transform_5, window_bounds = array<i64: 128, 4>}]} {
    %c0 = arith.constant 0 : index
    %c0_0 = arith.constant 0 : index
    %0 = vector.load %arg1[%c0, %c0_0] : memref<128x32xf32, #tpu.memory_space<vmem>>, vector<128x32xf32>
    %c0_1 = arith.constant 0 : index
    %c0_2 = arith.constant 0 : index
    %1 = vector.load %arg2[%c0_1, %c0_2] : memref<32x32xf32, #tpu.memory_space<vmem>>, vector<32x32xf32>
    %cst = arith.constant dense<0.000000e+00> : vector<128x32xf32>
    %2 = tpu.matmul %0, %1, %cst {dimension_numbers = #tpu.dot_dimension_numbers<[1], [0], [0], [1], [0, 0, 1, 1], [], []>} : vector<128x32xf32>, vector<32x32xf32>, vector<128x32xf32> -> vector<128x32xf32>
    %c0_3 = arith.constant 0 : index
    %c0_4 = arith.constant 0 : index
    %3 = vector.load %arg3[%c0_3, %c0_4] : memref<1x32xf32, #tpu.memory_space<vmem>>, vector<1x32xf32>
    %4 = vector.broadcast %3 : vector<1x32xf32> to vector<128x32xf32>
    %5 = arith.addf %2, %4 : vector<128x32xf32>
    %c0_5 = arith.constant 0 : index
    %c0_6 = arith.constant 0 : index
    %6 = vector.load %arg5[%c0_5, %c0_6] : memref<128x32xf32, #tpu.memory_space<vmem>>, vector<128x32xf32>
    tpu.vector_store %arg5[%c0_5, %c0_6], %5 {strides = array<i32>} : memref<128x32xf32, #tpu.memory_space<vmem>>, vector<128x32xf32>,
    %c0_7 = arith.constant 0 : index
    %c0_8 = arith.constant 0 : index
    %7 = vector.load %arg4[%c0_7, %c0_8] : memref<32x4xf32, #tpu.memory_space<vmem>>, vector<32x4xf32>
    %cst_9 = arith.constant dense<0.000000e+00> : vector<128x4xf32>
    %8 = tpu.matmul %5, %7, %cst_9 {dimension_numbers = #tpu.dot_dimension_numbers<[1], [0], [0], [1], [0, 0, 1, 1], [], []>} : vector<128x32xf32>, vector<32x4xf32>, vector<128x4xf32> -> vector<128x4xf32>
    %c0_10 = arith.constant 0 : index
    %c0_11 = arith.constant 0 : index
    %9 = vector.load %arg6[%c0_10, %c0_11] : memref<128x4xf32, #tpu.memory_space<vmem>>, vector<128x4xf32>
    tpu.vector_store %arg6[%c0_10, %c0_11], %8 {strides = array<i32>} : memref<128x4xf32, #tpu.memory_space<vmem>>, vector<128x4xf32>,
    return
  }
  func.func @transform_0(%arg0: i32) -> (i32, i32) {
    %c0_i32 = arith.constant 0 : i32
    %c0_i32_0 = arith.constant 0 : i32
    return %arg0, %c0_i32 : i32, i32
  }
  func.func @transform_1(%arg0: i32) -> (i32, i32) {
    %c0_i32 = arith.constant 0 : i32
    %c0_i32_0 = arith.constant 0 : i32
    %c0_i32_1 = arith.constant 0 : i32
    return %c0_i32, %c0_i32_0 : i32, i32
  }
  func.func @transform_2(%arg0: i32) -> (i32, i32) {
    %c0_i32 = arith.constant 0 : i32
    %c0_i32_0 = arith.constant 0 : i32
    %c0_i32_1 = arith.constant 0 : i32
    return %c0_i32, %c0_i32_0 : i32, i32
  }
  func.func @transform_3(%arg0: i32) -> (i32, i32) {
    %c0_i32 = arith.constant 0 : i32
    %c0_i32_0 = arith.constant 0 : i32
    %c0_i32_1 = arith.constant 0 : i32
    return %c0_i32, %c0_i32_0 : i32, i32
  }
  func.func @transform_4(%arg0: i32) -> (i32, i32) {
    %c0_i32 = arith.constant 0 : i32
    %c0_i32_0 = arith.constant 0 : i32
    return %arg0, %c0_i32 : i32, i32
  }
  func.func @transform_5(%arg0: i32) -> (i32, i32) {
    %c0_i32 = arith.constant 0 : i32
    %c0_i32_0 = arith.constant 0 : i32
    return %arg0, %c0_i32 : i32, i32
  }
}

</mosaic_0001>

<llo_original>
// kernel: tpu_custom_call.1
$region0: #{tpu_custom_call.1}
  #allocation0 [shape = 'u32[]', space=smem, size = 0x4, offset = 0x4, fixed_abs, tag = 'smem constant byte address 0x4 - core index']
  #allocation1 [shape = 'u32[72,128]{1,0:T(1,128)}', space=vmem, size = 0x9000, scoped, tag = 'internal scratch']
  %s0 = inlined_call_operand.vmem [shape: f32[256,32], index: 0, kind: input, shape index: {}]
  %s1 = inlined_call_operand.vmem [shape: f32[32,32], index: 1, kind: input, shape index: {}]
  %s2 = inlined_call_operand.vmem [shape: f32[1,32], index: 2, kind: input, shape index: {}]
  %s3 = inlined_call_operand.vmem [shape: f32[32,4], index: 3, kind: input, shape index: {}]
  %s4 = inlined_call_operand.vmem [shape: f32[256,32], index: 4, kind: output, shape index: {0}]
  %s5 = inlined_call_operand.vmem [shape: f32[256,4], index: 5, kind: output, shape index: {1}]
  %6 = xla_tuple %s4, %s5
  %s7 = sld [smem:[#allocation0]]
  $region57: #{tpu_custom_call.1} parent=0
    _
  %s9 = ssub.s32 1, %s7
  %s10 = scalar_select 0, %s9, %s7
  loop: start=0, step=1, limit=4
  $region2: #{tpu_custom_call.1} parent=0 // loop_pre_header
    _
  $region3: #{tpu_custom_call.1} parent=0 // loop_header
    %s12 = sphi 0, %s16
    %p13 = scmp.ge.s32.totalorder %s12, 4
    %s22 = sphi 0, %s24
    %s25 = sphi 0, %s22
    %s26 = sphi 0, %s25
    %s42 = sphi 0, %s26
    %s46 = sphi 0, %s46
    %s48 = sphi 0, %s46
    %s49 = sphi 0, %s48
    %s63 = sphi 0, %s49
    %s67 = sphi 0, %s67
    %s69 = sphi 0, %s67
    %s70 = sphi 0, %s69
    %s84 = sphi 0, %s70
    %s88 = sphi 0, %s88
    %s90 = sphi 0, %s88
    %s91 = sphi 0, %s90
    %s105 = sphi 0, %s91
    %s111 = sphi 0, %s113
    %s114 = sphi 0, %s111
    %s115 = sphi 0, %s114
    %s131 = sphi 0, %s115
    %s137 = sphi 0, %s139
    %s140 = sphi 0, %s137
    %s141 = sphi 0, %s140
    %s157 = sphi 0, %s141
  $region4: #{tpu_custom_call.1} parent=0 // loop_header_branch
    %15 = sbr.rel (%p13) target = $region8
  $region5: #{tpu_custom_call.1} parent=0 // loop_body
    %s17 = ssub.s32 %s12, 1
    %s18 = ssub.s32 %s12, 2
    %s19 = sadd.s32 %s12, 1
    %s20 = ssub.s32 %s12, %s19
    %p21 = scmp.eq.s32.totalorder %s20, 0
    %s23 = sadd.s32 %s22, 1
    %s24 = scalar_select %p21, %s22, %s23
    %p27 = pneg %p21
    %p28 = scmp.eq.s32.totalorder %s12, 1
    %p29 = por %p27, %p28
    %p30 = scmp.ne.s32.totalorder %s22, %s25
    %p31 = scmp.eq.s32.totalorder %s12, 0
    %p32 = por %p30, %p31
    %p33 = scmp.ne.s32.totalorder %s22, %s25
    %p34 = scmp.eq.s32.totalorder %s17, 1
    %p35 = por %p33, %p34
    %p36 = scmp.ne.s32.totalorder %s25, %s26
    %p37 = scmp.eq.s32.totalorder %s17, 0
    %p38 = por %p36, %p37
    %p39 = scmp.ne.s32.totalorder %s25, %s26
    %p40 = scmp.eq.s32.totalorder %s18, 1
    %p41 = por %p39, %p40
    %p43 = scmp.ne.s32.totalorder %s26, %s42
    %p44 = scmp.eq.s32.totalorder %s18, 0
    %p45 = por %p43, %p44
    %s47 = sadd.s32 %s46, 1
    %p50 = scmp.eq.s32.totalorder %s12, 1
    %p51 = scmp.ne.s32.totalorder %s46, %s48
    %p52 = scmp.eq.s32.totalorder %s12, 0
    %p53 = por %p51, %p52
    %p54 = scmp.ne.s32.totalorder %s46, %s48
    %p55 = scmp.eq.s32.totalorder %s17, 1
    %p56 = por %p54, %p55
    %p57 = scmp.ne.s32.totalorder %s48, %s49
    %p58 = scmp.eq.s32.totalorder %s17, 0
    %p59 = por %p57, %p58
    %p60 = scmp.ne.s32.totalorder %s48, %s49
    %p61 = scmp.eq.s32.totalorder %s18, 1
    %p62 = por %p60, %p61
    %p64 = scmp.ne.s32.totalorder %s49, %s63
    %p65 = scmp.eq.s32.totalorder %s18, 0
    %p66 = por %p64, %p65
    %s68 = sadd.s32 %s67, 1
    %p71 = scmp.eq.s32.totalorder %s12, 1
    %p72 = scmp.ne.s32.totalorder %s67, %s69
    %p73 = scmp.eq.s32.totalorder %s12, 0
    %p74 = por %p72, %p73
    %p75 = scmp.ne.s32.totalorder %s67, %s69
    %p76 = scmp.eq.s32.totalorder %s17, 1
    %p77 = por %p75, %p76
    %p78 = scmp.ne.s32.totalorder %s69, %s70
    %p79 = scmp.eq.s32.totalorder %s17, 0
    %p80 = por %p78, %p79
    %p81 = scmp.ne.s32.totalorder %s69, %s70
    %p82 = scmp.eq.s32.totalorder %s18, 1
    %p83 = por %p81, %p82
    %p85 = scmp.ne.s32.totalorder %s70, %s84
    %p86 = scmp.eq.s32.totalorder %s18, 0
    %p87 = por %p85, %p86
    %s89 = sadd.s32 %s88, 1
    %p92 = scmp.eq.s32.totalorder %s12, 1
    %p93 = scmp.ne.s32.totalorder %s88, %s90
    %p94 = scmp.eq.s32.totalorder %s12, 0
    %p95 = por %p93, %p94
    %p96 = scmp.ne.s32.totalorder %s88, %s90
    %p97 = scmp.eq.s32.totalorder %s17, 1
    %p98 = por %p96, %p97
    %p99 = scmp.ne.s32.totalorder %s90, %s91
    %p100 = scmp.eq.s32.totalorder %s17, 0
    %p101 = por %p99, %p100
    %p102 = scmp.ne.s32.totalorder %s90, %s91
    %p103 = scmp.eq.s32.totalorder %s18, 1
    %p104 = por %p102, %p103
    %p106 = scmp.ne.s32.totalorder %s91, %s105
    %p107 = scmp.eq.s32.totalorder %s18, 0
    %p108 = por %p106, %p107
    %s109 = ssub.s32 %s12, %s19
    %p110 = scmp.eq.s32.totalorder %s109, 0
    %s112 = sadd.s32 %s111, 1
    %s113 = scalar_select %p110, %s111, %s112
    %p116 = pneg %p110
    %p117 = scmp.eq.s32.totalorder %s12, 1
    %p118 = por %p116, %p117
    %p119 = scmp.ne.s32.totalorder %s111, %s114
    %p120 = scmp.eq.s32.totalorder %s12, 0
    %p121 = por %p119, %p120
    %p122 = scmp.ne.s32.totalorder %s111, %s114
    %p123 = scmp.eq.s32.totalorder %s17, 1
    %p124 = por %p122, %p123
    %p125 = scmp.ne.s32.totalorder %s114, %s115
    %p126 = scmp.eq.s32.totalorder %s17, 0
    %p127 = por %p125, %p126
    %p128 = scmp.ne.s32.totalorder %s114, %s115
    %p129 = scmp.eq.s32.totalorder %s18, 1
    %p130 = por %p128, %p129
    %p132 = scmp.ne.s32.totalorder %s115, %s131
    %p133 = scmp.eq.s32.totalorder %s18, 0
    %p134 = por %p132, %p133
    %s135 = ssub.s32 %s12, %s19
    %p136 = scmp.eq.s32.totalorder %s135, 0
    %s138 = sadd.s32 %s137, 1
    %s139 = scalar_select %p136, %s137, %s138
    %p142 = pneg %p136
    %p143 = scmp.eq.s32.totalorder %s12, 1
    %p144 = por %p142, %p143
    %p145 = scmp.ne.s32.totalorder %s137, %s140
    %p146 = scmp.eq.s32.totalorder %s12, 0
    %p147 = por %p145, %p146
    %p148 = scmp.ne.s32.totalorder %s137, %s140
    %p149 = scmp.eq.s32.totalorder %s17, 1
    %p150 = por %p148, %p149
    %p151 = scmp.ne.s32.totalorder %s140, %s141
    %p152 = scmp.eq.s32.totalorder %s17, 0
    %p153 = por %p151, %p152
    %p154 = scmp.ne.s32.totalorder %s140, %s141
    %p155 = scmp.eq.s32.totalorder %s18, 1
    %p156 = por %p154, %p155
    %p158 = scmp.ne.s32.totalorder %s141, %s157
    %p159 = scmp.eq.s32.totalorder %s18, 0
    %p160 = por %p158, %p159
    %p161 = scmp.le.s32.totalorder 1, %s12
    %p162 = scmp.lt.s32.totalorder %s12, 3
    %p163 = pnand %p161, %p162
    %p164 = pneg %p163
    // Predicated region
    $region9: #{tpu_custom_call.1} parent=5 // pred_check
      _
    $region10: #{tpu_custom_call.1} parent=5 // pred_check_branch
      %166 = sbr.rel (%p163) target = $region12
    $region11: #{tpu_custom_call.1} parent=5 // pred_region
      %s167 = ssub.s32 %s12, 1
      // Predicated region
      $region13: #{tpu_custom_call.1} parent=11 // pred_check
        %p168 = pneg %p59
      $region14: #{tpu_custom_call.1} parent=11 // pred_check_branch
        %170 = sbr.rel (%p168) target = $region16
      $region15: #{tpu_custom_call.1} parent=11 // pred_region
        _
      $region16: #{tpu_custom_call.1} parent=11 // pred_fallthru
        _
      // Predicated region
      $region17: #{tpu_custom_call.1} parent=11 // pred_check
        %p171 = pneg %p80
      $region18: #{tpu_custom_call.1} parent=11 // pred_check_branch
        %173 = sbr.rel (%p171) target = $region20
      $region19: #{tpu_custom_call.1} parent=11 // pred_region
        _
      $region20: #{tpu_custom_call.1} parent=11 // pred_fallthru
        _
      // Predicated region
      $region21: #{tpu_custom_call.1} parent=11 // pred_check
        %p174 = pneg %p101
      $region22: #{tpu_custom_call.1} parent=11 // pred_check_branch
        %176 = sbr.rel (%p174) target = $region24
      $region23: #{tpu_custom_call.1} parent=11 // pred_region
        _
      $region24: #{tpu_custom_call.1} parent=11 // pred_fallthru
        _
    $region12: #{tpu_custom_call.1} parent=5 // pred_fallthru
      _
    %p177 = scmp.lt.s32.totalorder %s12, 2
    // Predicated region
    $region25: #{tpu_custom_call.1} parent=5 // pred_check
      %p178 = pneg %p177
    $region26: #{tpu_custom_call.1} parent=5 // pred_check_branch
      %180 = sbr.rel (%p178) target = $region28
    $region27: #{tpu_custom_call.1} parent=5 // pred_region
      // Predicated region
      $region29: #{tpu_custom_call.1} parent=27 // pred_check
        %p181 = pneg %p32
      $region30: #{tpu_custom_call.1} parent=27 // pred_check_branch
        %183 = sbr.rel (%p181) target = $region32
      $region31: #{tpu_custom_call.1} parent=27 // pred_region
        %s184 = smul.u32 16, %s12
        %p185 = scmp.lt.s32.totalorder %s184, 31
        %s186 = scalar_select %p185, %s184, 31
        %s187 = smul.addr %s186, 8
        %s188 = scalar_lea.vmem %s0, %s187
        %s189 = smul.u32 16, %s12
      $region32: #{tpu_custom_call.1} parent=27 // pred_fallthru
        _
    $region28: #{tpu_custom_call.1} parent=5 // pred_fallthru
      _
    %p190 = scmp.le.s32.totalorder 1, %s12
    %p191 = scmp.lt.s32.totalorder %s12, 3
    %p192 = pnand %p190, %p191
    %p193 = pneg %p192
    // Predicated region
    $region33: #{tpu_custom_call.1} parent=5 // pred_check
      _
    $region34: #{tpu_custom_call.1} parent=5 // pred_check_branch
      %195 = sbr.rel (%p192) target = $region36
    $region35: #{tpu_custom_call.1} parent=5 // pred_region
      %s196 = ssub.s32 %s12, 1
      %s197 = smul.u32 16, %s17
      %p198 = scmp.lt.s32.totalorder %s197, 31
      %s199 = scalar_select %p198, %s197, 31
      %s200 = smul.addr %s199, 8
      %s201 = scalar_lea.vmem %s0, %s200
      %p202 = pneg %p38
      %p203 = pneg %p35
      %p204 = pneg %p59
      %p205 = pneg %p56
      %p206 = pneg %p80
      %p207 = pneg %p77
      %p208 = pneg %p101
      %p209 = pneg %p98
      %p210 = pneg %p127
      %p211 = pneg %p124
      %s212 = smul.u32 16, %s17
      %p213 = scmp.lt.s32.totalorder %s212, 31
      %s214 = scalar_select %p213, %s212, 31
      %s215 = smul.addr %s214, 8
      %s216 = scalar_lea.vmem %s4, %s215
      %p217 = pneg %p153
      %p218 = pneg %p150
      %s219 = smul.u32 16, %s17
      %p220 = scmp.lt.s32.totalorder %s219, 31
      %s221 = scalar_select %p220, %s219, 31
      %s222 = smul.addr %s221, 8
      %s223 = scalar_lea.vmem %s5, %s222
      %s224 = smul.u32 16, %s17
      %p225 = scmp.lt.s32.totalorder %s224, 31
      %s226 = scalar_select %p225, %s224, 31
      %s227 = smul.addr %s226, 8
      %s228 = scalar_lea.vmem %s0, %s227
      %s229 = smul.u32 16, %s17
      %s230 = smul.u32 16, %s17
      %p231 = scmp.lt.s32.totalorder %s230, 31
      %s232 = scalar_select %p231, %s230, 31
      %s233 = smul.addr %s232, 8
      %s234 = scalar_lea.vmem %s4, %s233
      %s235 = smul.u32 16, %s17
      %s236 = smul.u32 16, %s17
      %p237 = scmp.lt.s32.totalorder %s236, 31
      %s238 = scalar_select %p237, %s236, 31
      %s239 = smul.addr %s238, 8
      %s240 = scalar_lea.vmem %s5, %s239
      %s241 = smul.u32 16, %s17
      %v242 = vld [vmem:[%s228] sm:$0xff]
      %v243 = vld [vmem:[%s228 + $0x8] sm:$0xff]
      %v244 = vld [vmem:[%s228 + $0x10] sm:$0xff]
      %v245 = vld [vmem:[%s228 + $0x18] sm:$0xff]
      %v246 = vld [vmem:[%s228 + $0x20] sm:$0xff]
      %v247 = vld [vmem:[%s228 + $0x28] sm:$0xff]
      %v248 = vld [vmem:[%s228 + $0x30] sm:$0xff]
      %v249 = vld [vmem:[%s228 + $0x38] sm:$0xff]
      %v250 = vld [vmem:[%s228 + $0x40] sm:$0xff]
      %v251 = vld [vmem:[%s228 + $0x48] sm:$0xff]
      %v252 = vld [vmem:[%s228 + $0x50] sm:$0xff]
      %v253 = vld [vmem:[%s228 + $0x58] sm:$0xff]
      %v254 = vld [vmem:[%s228 + $0x60] sm:$0xff]
      %v255 = vld [vmem:[%s228 + $0x68] sm:$0xff]
      %v256 = vld [vmem:[%s228 + $0x70] sm:$0xff]
      %v257 = vld [vmem:[%s228 + $0x78] sm:$0xff]
      %v258 = vld [vmem:[%s1] sm:$0xff]
      %v259 = vld [vmem:[%s1 + $0x8] sm:$0xff]
      %v260 = vld [vmem:[%s1 + $0x10] sm:$0xff]
      %v261 = vld [vmem:[%s1 + $0x18] sm:$0xff]
      %v262 = vld [vmem:[%s2] sm:$0x1]
      %v264 = vperm.slane %v262, 0
      %vm266 = vcmask 261120
      %v268 = vsel %vm266, %v242, 0
      %v271 = vsel %vm266, %v243, 0
      %v274 = vsel %vm266, %v244, 0
      %v277 = vsel %vm266, %v245, 0
      %v280 = vsel %vm266, %v246, 0
      %v283 = vsel %vm266, %v247, 0
      %v286 = vsel %vm266, %v248, 0
      %v289 = vsel %vm266, %v249, 0
      %v292 = vsel %vm266, %v250, 0
      %v295 = vsel %vm266, %v251, 0
      %v298 = vsel %vm266, %v252, 0
      %v301 = vsel %vm266, %v253, 0
      %v304 = vsel %vm266, %v254, 0
      %v307 = vsel %vm266, %v255, 0
      %v310 = vsel %vm266, %v256, 0
      %v313 = vsel %vm266, %v257, 0
      %315 = vmatpush.msra.mxu0 0.0
      %316 = vmatpush.msra.mxu0 0.0
      %317 = vmatpush.msra.mxu0 0.0
      %318 = vmatpush.msra.mxu0 0.0
      %319 = vmatpush.msra.mxu0 0.0
      %320 = vmatpush.msra.mxu0 0.0
      %321 = vmatpush.msra.mxu0 0.0
      %322 = vmatpush.msra.mxu0 0.0
      %323 = vmatpush.msra.mxu0 0.0
      %324 = vmatpush.msra.mxu0 0.0
      %325 = vmatpush.msra.mxu0 0.0
      %326 = vmatpush.msra.mxu0 0.0
      %327 = vmatpush.msra.mxu0 %v261
      %328 = vmatpush.msra.mxu0 %v260
      %329 = vmatpush.msra.mxu0 %v259
      %330 = vmatpush.msra.mxu0 %v258
      %331 = vmatmul.f32.gmra.mxu0 %v268
      %v332 = vpop.f32.mrf.mxu0
      %v333 = vadd.f32 %v264, %v332
      %334 = vmatmul.f32.gmra.mxu0 %v271
      %v335 = vpop.f32.mrf.mxu0
      %v336 = vadd.f32 %v264, %v335
      %337 = vmatmul.f32.gmra.mxu0 %v274
      %v338 = vpop.f32.mrf.mxu0
      %v339 = vadd.f32 %v264, %v338
      %340 = vmatmul.f32.gmra.mxu0 %v277
      %v341 = vpop.f32.mrf.mxu0
      %v342 = vadd.f32 %v264, %v341
      %343 = vmatmul.f32.gmra.mxu0 %v280
      %v344 = vpop.f32.mrf.mxu0
      %v345 = vadd.f32 %v264, %v344
      %346 = vmatmul.f32.gmra.mxu0 %v283
      %v347 = vpop.f32.mrf.mxu0
      %v348 = vadd.f32 %v264, %v347
      %349 = vmatmul.f32.gmra.mxu0 %v286
      %v350 = vpop.f32.mrf.mxu0
      %v351 = vadd.f32 %v264, %v350
      %352 = vmatmul.f32.gmra.mxu0 %v289
      %v353 = vpop.f32.mrf.mxu0
      %v354 = vadd.f32 %v264, %v353
      %355 = vmatmul.f32.gmra.mxu0 %v292
      %v356 = vpop.f32.mrf.mxu0
      %v357 = vadd.f32 %v264, %v356
      %358 = vmatmul.f32.gmra.mxu0 %v295
      %v359 = vpop.f32.mrf.mxu0
      %v360 = vadd.f32 %v264, %v359
      %361 = vmatmul.f32.gmra.mxu0 %v298
      %v362 = vpop.f32.mrf.mxu0
      %v363 = vadd.f32 %v264, %v362
      %364 = vmatmul.f32.gmra.mxu0 %v301
      %v365 = vpop.f32.mrf.mxu0
      %v366 = vadd.f32 %v264, %v365
      %367 = vmatmul.f32.gmra.mxu0 %v304
      %v368 = vpop.f32.mrf.mxu0
      %v369 = vadd.f32 %v264, %v368
      %370 = vmatmul.f32.gmra.mxu0 %v307
      %v371 = vpop.f32.mrf.mxu0
      %v372 = vadd.f32 %v264, %v371
      %373 = vmatmul.f32.gmra.mxu0 %v310
      %v374 = vpop.f32.mrf.mxu0
      %v375 = vadd.f32 %v264, %v374
      %376 = vmatmul.f32.gmra.mxu0 %v313
      %v377 = vpop.f32.mrf.mxu0
      %v378 = vadd.f32 %v264, %v377
      %379 = vdwg.mxu0
      %380 = vst.msk [vmem:[%s234] sm:$0xff] %vm266, %v333
      %381 = vst.msk [vmem:[%s234 + $0x8] sm:$0xff] %vm266, %v336
      %382 = vst.msk [vmem:[%s234 + $0x10] sm:$0xff] %vm266, %v339
      %383 = vst.msk [vmem:[%s234 + $0x18] sm:$0xff] %vm266, %v342
      %384 = vst.msk [vmem:[%s234 + $0x20] sm:$0xff] %vm266, %v345
      %385 = vst.msk [vmem:[%s234 + $0x28] sm:$0xff] %vm266, %v348
      %386 = vst.msk [vmem:[%s234 + $0x30] sm:$0xff] %vm266, %v351
      %387 = vst.msk [vmem:[%s234 + $0x38] sm:$0xff] %vm266, %v354
      %388 = vst.msk [vmem:[%s234 + $0x40] sm:$0xff] %vm266, %v357
      %389 = vst.msk [vmem:[%s234 + $0x48] sm:$0xff] %vm266, %v360
      %390 = vst.msk [vmem:[%s234 + $0x50] sm:$0xff] %vm266, %v363
      %391 = vst.msk [vmem:[%s234 + $0x58] sm:$0xff] %vm266, %v366
      %392 = vst.msk [vmem:[%s234 + $0x60] sm:$0xff] %vm266, %v369
      %393 = vst.msk [vmem:[%s234 + $0x68] sm:$0xff] %vm266, %v372
      %394 = vst.msk [vmem:[%s234 + $0x70] sm:$0xff] %vm266, %v375
      %395 = vst.msk [vmem:[%s234 + $0x78] sm:$0xff] %vm266, %v378
      %v396 = vld [vmem:[%s3] sm:$0xff]
      %v397 = vld [vmem:[%s3 + $0x8] sm:$0xff]
      %v398 = vld [vmem:[%s3 + $0x10] sm:$0xff]
      %v399 = vld [vmem:[%s3 + $0x18] sm:$0xff]
      %v401 = vsel %vm266, %v333, 0
      %v404 = vsel %vm266, %v336, 0
      %v407 = vsel %vm266, %v339, 0
      %v410 = vsel %vm266, %v342, 0
      %v413 = vsel %vm266, %v345, 0
      %v416 = vsel %vm266, %v348, 0
      %v419 = vsel %vm266, %v351, 0
      %v422 = vsel %vm266, %v354, 0
      %v425 = vsel %vm266, %v357, 0
      %v428 = vsel %vm266, %v360, 0
      %v431 = vsel %vm266, %v363, 0
      %v434 = vsel %vm266, %v366, 0
      %v437 = vsel %vm266, %v369, 0
      %v440 = vsel %vm266, %v372, 0
      %v443 = vsel %vm266, %v375, 0
      %v446 = vsel %vm266, %v378, 0
      %448 = vmatpush.msra.mxu0 0.0
      %449 = vmatpush.msra.mxu0 0.0
      %450 = vmatpush.msra.mxu0 0.0
      %451 = vmatpush.msra.mxu0 0.0
      %452 = vmatpush.msra.mxu0 0.0
      %453 = vmatpush.msra.mxu0 0.0
      %454 = vmatpush.msra.mxu0 0.0
      %455 = vmatpush.msra.mxu0 0.0
      %456 = vmatpush.msra.mxu0 0.0
      %457 = vmatpush.msra.mxu0 0.0
      %458 = vmatpush.msra.mxu0 0.0
      %459 = vmatpush.msra.mxu0 0.0
      %460 = vmatpush.msra.mxu0 %v399
      %461 = vmatpush.msra.mxu0 %v398
      %462 = vmatpush.msra.mxu0 %v397
      %463 = vmatpush.msra.mxu0 %v396
      %464 = vmatmul.f32.gmra.mxu0 %v401
      %v465 = vpop.f32.mrf.mxu0
      %v466 = vadd.f32 0.0, %v465
      %467 = vmatmul.f32.gmra.mxu0 %v404
      %v468 = vpop.f32.mrf.mxu0
      %v469 = vadd.f32 0.0, %v468
      %470 = vmatmul.f32.gmra.mxu0 %v407
      %v471 = vpop.f32.mrf.mxu0
      %v472 = vadd.f32 0.0, %v471
      %473 = vmatmul.f32.gmra.mxu0 %v410
      %v474 = vpop.f32.mrf.mxu0
      %v475 = vadd.f32 0.0, %v474
      %476 = vmatmul.f32.gmra.mxu0 %v413
      %v477 = vpop.f32.mrf.mxu0
      %v478 = vadd.f32 0.0, %v477
      %479 = vmatmul.f32.gmra.mxu0 %v416
      %v480 = vpop.f32.mrf.mxu0
      %v481 = vadd.f32 0.0, %v480
      %482 = vmatmul.f32.gmra.mxu0 %v419
      %v483 = vpop.f32.mrf.mxu0
      %v484 = vadd.f32 0.0, %v483
      %485 = vmatmul.f32.gmra.mxu0 %v422
      %v486 = vpop.f32.mrf.mxu0
      %v487 = vadd.f32 0.0, %v486
      %488 = vmatmul.f32.gmra.mxu0 %v425
      %v489 = vpop.f32.mrf.mxu0
      %v490 = vadd.f32 0.0, %v489
      %491 = vmatmul.f32.gmra.mxu0 %v428
      %v492 = vpop.f32.mrf.mxu0
      %v493 = vadd.f32 0.0, %v492
      %494 = vmatmul.f32.gmra.mxu0 %v431
      %v495 = vpop.f32.mrf.mxu0
      %v496 = vadd.f32 0.0, %v495
      %497 = vmatmul.f32.gmra.mxu0 %v434
      %v498 = vpop.f32.mrf.mxu0
      %v499 = vadd.f32 0.0, %v498
      %500 = vmatmul.f32.gmra.mxu0 %v437
      %v501 = vpop.f32.mrf.mxu0
      %v502 = vadd.f32 0.0, %v501
      %503 = vmatmul.f32.gmra.mxu0 %v440
      %v504 = vpop.f32.mrf.mxu0
      %v505 = vadd.f32 0.0, %v504
      %506 = vmatmul.f32.gmra.mxu0 %v443
      %v507 = vpop.f32.mrf.mxu0
      %v508 = vadd.f32 0.0, %v507
      %509 = vmatmul.f32.gmra.mxu0 %v446
      %v510 = vpop.f32.mrf.mxu0
      %v511 = vadd.f32 0.0, %v510
      %512 = vdwg.mxu0
      %vm513 = vcmask 31744
      %514 = vst.msk [vmem:[%s240] sm:$0xff] %vm513, %v466
      %515 = vst.msk [vmem:[%s240 + $0x8] sm:$0xff] %vm513, %v469
      %516 = vst.msk [vmem:[%s240 + $0x10] sm:$0xff] %vm513, %v472
      %517 = vst.msk [vmem:[%s240 + $0x18] sm:$0xff] %vm513, %v475
      %518 = vst.msk [vmem:[%s240 + $0x20] sm:$0xff] %vm513, %v478
      %519 = vst.msk [vmem:[%s240 + $0x28] sm:$0xff] %vm513, %v481
      %520 = vst.msk [vmem:[%s240 + $0x30] sm:$0xff] %vm513, %v484
      %521 = vst.msk [vmem:[%s240 + $0x38] sm:$0xff] %vm513, %v487
      %522 = vst.msk [vmem:[%s240 + $0x40] sm:$0xff] %vm513, %v490
      %523 = vst.msk [vmem:[%s240 + $0x48] sm:$0xff] %vm513, %v493
      %524 = vst.msk [vmem:[%s240 + $0x50] sm:$0xff] %vm513, %v496
      %525 = vst.msk [vmem:[%s240 + $0x58] sm:$0xff] %vm513, %v499
      %526 = vst.msk [vmem:[%s240 + $0x60] sm:$0xff] %vm513, %v502
      %527 = vst.msk [vmem:[%s240 + $0x68] sm:$0xff] %vm513, %v505
      %528 = vst.msk [vmem:[%s240 + $0x70] sm:$0xff] %vm513, %v508
      %529 = vst.msk [vmem:[%s240 + $0x78] sm:$0xff] %vm513, %v511
      %s530 = smul.u32 16, %s17
      %p531 = scmp.lt.s32.totalorder %s530, 31
      %s532 = scalar_select %p531, %s530, 31
      %s533 = smul.addr %s532, 8
      %s534 = scalar_lea.vmem %s4, %s533
      %s535 = smul.u32 16, %s17
      %p536 = scmp.lt.s32.totalorder %s535, 31
      %s537 = scalar_select %p536, %s535, 31
      %s538 = smul.addr %s537, 8
      %s539 = scalar_lea.vmem %s5, %s538
      // Predicated region
      $region37: #{tpu_custom_call.1} parent=35 // pred_check
        %p540 = pneg %p124
      $region38: #{tpu_custom_call.1} parent=35 // pred_check_branch
        %542 = sbr.rel (%p540) target = $region40
      $region39: #{tpu_custom_call.1} parent=35 // pred_region
        %s543 = smul.u32 16, %s17
      $region40: #{tpu_custom_call.1} parent=35 // pred_fallthru
        _
      // Predicated region
      $region41: #{tpu_custom_call.1} parent=35 // pred_check
        %p544 = pneg %p150
      $region42: #{tpu_custom_call.1} parent=35 // pred_check_branch
        %546 = sbr.rel (%p544) target = $region44
      $region43: #{tpu_custom_call.1} parent=35 // pred_region
        %s547 = smul.u32 16, %s17
      $region44: #{tpu_custom_call.1} parent=35 // pred_fallthru
        _
    $region36: #{tpu_custom_call.1} parent=5 // pred_fallthru
      _
    %p548 = scmp.le.s32.totalorder 2, %s12
    // Predicated region
    $region45: #{tpu_custom_call.1} parent=5 // pred_check
      %p549 = pneg %p548
    $region46: #{tpu_custom_call.1} parent=5 // pred_check_branch
      %551 = sbr.rel (%p549) target = $region48
    $region47: #{tpu_custom_call.1} parent=5 // pred_region
      %s552 = ssub.s32 %s12, 2
      // Predicated region
      $region49: #{tpu_custom_call.1} parent=47 // pred_check
        %p553 = pneg %p130
      $region50: #{tpu_custom_call.1} parent=47 // pred_check_branch
        %555 = sbr.rel (%p553) target = $region52
      $region51: #{tpu_custom_call.1} parent=47 // pred_region
        %s556 = smul.u32 16, %s18
        %p557 = scmp.lt.s32.totalorder %s556, 31
        %s558 = scalar_select %p557, %s556, 31
        %s559 = smul.addr %s558, 8
        %s560 = scalar_lea.vmem %s4, %s559
      $region52: #{tpu_custom_call.1} parent=47 // pred_fallthru
        _
      // Predicated region
      $region53: #{tpu_custom_call.1} parent=47 // pred_check
        %p561 = pneg %p156
      $region54: #{tpu_custom_call.1} parent=47 // pred_check_branch
        %563 = sbr.rel (%p561) target = $region56
      $region55: #{tpu_custom_call.1} parent=47 // pred_region
        %s564 = smul.u32 16, %s18
        %p565 = scmp.lt.s32.totalorder %s564, 31
        %s566 = scalar_select %p565, %s564, 31
        %s567 = smul.addr %s566, 8
        %s568 = scalar_lea.vmem %s5, %s567
      $region56: #{tpu_custom_call.1} parent=47 // pred_fallthru
        _
    $region48: #{tpu_custom_call.1} parent=5 // pred_fallthru
      _
  $region6: #{tpu_custom_call.1} parent=0 // loop_footer
    %s16 = sadd.s32 1, %s12
  $region7: #{tpu_custom_call.1} parent=0 // loop_footer_branch
    %11 = sbr.rel target = $region3
  $region8: #{tpu_custom_call.1} parent=0 // loop_exit
    _

</llo_original>
